<compile_context>
chip_gen: v5e
topology: v5e:2x2
jax: 0.10.0
libtpu: 0.0.40
codegen_flags: <defaults>
</compile_context>

<pallas_src>
import functools

import jax
import jax.numpy as jnp
from jax.experimental import pallas as pl
from jax.experimental.pallas import tpu as pltpu


def _label_smooth_ce_kernel(logits_ref, labels_ref, out_ref, *,
                            smooth_val, n_classes, batch, tile_b,
                            steps_per_split, need_mask):
    k = pl.program_id(1)                                    # sequential axis

    @pl.when(k == 0)
    def _():
        out_ref[...] = jnp.zeros_like(out_ref)              # per-split init

    raw = logits_ref[...]                                   # (TB, N) native dtype
    tb, n = raw.shape

    # Row max in the native dtype (exact), everything else in f32.
    m = jnp.max(raw, axis=1, keepdims=True).astype(jnp.float32)      # (TB, 1)
    x = raw.astype(jnp.float32)                                       # (TB, N)

    lse = jnp.log(jnp.sum(jnp.exp(x - m), axis=1, keepdims=True))     # (TB, 1)
    sum_x = jnp.sum(x, axis=1, keepdims=True)                         # (TB, 1)

    col = jax.lax.broadcasted_iota(jnp.int32, (tb, n), 1)             # class ids
    lbl = labels_ref[...]                                             # (TB, 1)
    x_lbl = jnp.sum(jnp.where(col == lbl, x, 0.0), axis=1, keepdims=True)

    ml = m + lse
    # Per-row sum_j logp_j * w_j (see header for the decomposition).
    row = (jnp.float32(smooth_val) * (sum_x - jnp.float32(n_classes) * ml)
           + jnp.float32(1.0 - 2.0 * smooth_val) * (x_lbl - ml))      # (TB, 1)

    if need_mask:
        # Rows past the true batch (ragged last tile / dead overshoot tile):
        # cheap per-row select -- never a per-element mask of the full tile.
        g = pl.program_id(0) * steps_per_split + k                    # tile id
        row_ids = g * tile_b + jax.lax.broadcasted_iota(jnp.int32, (tb, 1), 0)
        row = jnp.where(row_ids < batch, row, 0.0)

    out_ref[...] += row                                    # VMEM-resident acc


def _sublane_multiple(dtype):
    return {4: 8, 2: 16, 1: 32}.get(jnp.dtype(dtype).itemsize, 8)


def _choose_tile_b(batch, n_classes, dtype, f32_budget_bytes):
    # Size the f32 working tile (the upcast copy dominates VMEM for bf16).
    rows = f32_budget_bytes // max(1, n_classes * 4)
    mult = _sublane_multiple(dtype)
    rows = max(mult, (rows // mult) * mult)
    if rows >= batch:
        return batch                                       # single full block
    return rows


def label_smooth_ce_loss(logits, labels, ratio, *, tile_b=None, num_splits=None):
    """JAX/Pallas equivalent of LabelSmoothCELoss(ratio)(logits, labels)."""
    B, N = logits.shape
    val = float(ratio) / (N - 1)
    labels2d = labels.astype(jnp.int32).reshape(B, 1)

    # Generation-aware sizing: v7x has 64 MiB VMEM per TC, v5e/v6e have 128 MiB.
    try:
        vmem_cap = int(pltpu.get_tpu_info().vmem_capacity_bytes)
    except Exception:  # pragma: no cover - conservative fallback
        vmem_cap = 64 * 1024 * 1024
    if vmem_cap >= 96 * 1024 * 1024:
        f32_budget, vmem_limit = 6 * 1024 * 1024, 80 * 1024 * 1024
    else:
        f32_budget, vmem_limit = 4 * 1024 * 1024, 48 * 1024 * 1024

    if tile_b is None:
        tile_b = _choose_tile_b(B, N, logits.dtype, f32_budget)
    tile_b = min(int(tile_b), B)

    num_tiles = pl.cdiv(B, tile_b)
    if num_splits is None:
        num_splits = 2 if num_tiles >= 2 else 1            # both TCs on v7x
    num_splits = max(1, min(int(num_splits), num_tiles))
    steps = pl.cdiv(num_tiles, num_splits)

    # Overshoot handling: num_splits*steps may exceed num_tiles (dead tiles)
    # and the last real tile may be ragged; both are handled by a clamped
    # index_map plus the per-row mask in the kernel.
    need_mask = (num_splits * steps * tile_b) != B
    clamp = (num_splits * steps) > num_tiles

    def tile_idx(s, k):
        g = s * steps + k
        return jnp.minimum(g, num_tiles - 1) if clamp else g

    kernel = functools.partial(
        _label_smooth_ce_kernel,
        smooth_val=val, n_classes=N, batch=B, tile_b=tile_b,
        steps_per_split=steps, need_mask=need_mask)

    # TODO(synk): for very large class counts (vocab >= ~128K) add a second
    # grid axis over N with flash-style online m/lse/sum_x/x_lbl carries so the
    # f32 working set stays bounded inside v7x's 64 MiB VMEM.
    partial_rows = pl.pallas_call(
        kernel,
        out_shape=jax.ShapeDtypeStruct((num_splits * tile_b, 1), jnp.float32),
        grid=(num_splits, steps),
        in_specs=[
            pl.BlockSpec((tile_b, N), lambda s, k: (tile_idx(s, k), 0)),  # logits
            pl.BlockSpec((tile_b, 1), lambda s, k: (tile_idx(s, k), 0)),  # labels
        ],
        out_specs=pl.BlockSpec((tile_b, 1), lambda s, k: (s, 0)),  # per-split acc
        compiler_params=pltpu.CompilerParams(
            dimension_semantics=("parallel", "arbitrary"),
            vmem_limit_bytes=vmem_limit),
    )(logits, labels2d)

    # Final tiny reduction + scaling on the host-side XLA graph.
    return -jnp.sum(partial_rows) * jnp.float32(1.0 / B)


def _reference(logits, labels, ratio):
    B, N = logits.shape
    val = float(ratio) / (N - 1)
    one_hot = jnp.full((B, N), val, dtype=jnp.float32)
    one_hot = one_hot.at[jnp.arange(B), labels].set(1.0 - val)
    logp = jax.nn.log_softmax(logits.astype(jnp.float32), axis=1)
    return -jnp.sum(logp * one_hot) / B


if __name__ == "__main__":
    key = jax.random.PRNGKey(0)
    k1, k2, k3, k4, k5, k6 = jax.random.split(key, 6)
    ratio = 0.1

    # Case 1: small, single-tile, single-split path.
    B, N = 8, 32
    logits = jax.random.normal(k1, (B, N), dtype=jnp.float32)
    labels = jax.random.randint(k2, (B,), 0, N, dtype=jnp.int32)
    loss = jax.block_until_ready(label_smooth_ce_loss(logits, labels, ratio))
    ref = _reference(logits, labels, ratio)
    assert jnp.allclose(loss, ref, atol=5e-4, rtol=5e-4), (loss, ref)

    # Case 2: dual-split 2-D grid with a ragged last tile AND one dead
    # (fully masked, clamped-index) tile: B=20, tile_b=8 -> 3 real tiles,
    # 2 splits x 2 steps.
    B2, N2 = 20, 256
    logits2 = jax.random.normal(k3, (B2, N2), dtype=jnp.float32)
    labels2 = jax.random.randint(k4, (B2,), 0, N2, dtype=jnp.int32)
    loss2 = jax.block_until_ready(
        label_smooth_ce_loss(logits2, labels2, ratio, tile_b=8))
    ref2 = _reference(logits2, labels2, ratio)
    assert jnp.allclose(loss2, ref2, atol=5e-4, rtol=5e-4), (loss2, ref2)

    # Case 3: bf16 logits, exact-fit dual split (no masking) -- exercises the
    # native-dtype row max + f32 accumulation path.
    B3, N3 = 32, 128
    logits3 = jax.random.normal(k5, (B3, N3), dtype=jnp.float32).astype(jnp.bfloat16)
    labels3 = jax.random.randint(k6, (B3,), 0, N3, dtype=jnp.int32)
    loss3 = jax.block_until_ready(
        label_smooth_ce_loss(logits3, labels3, ratio, tile_b=16))
    ref3 = _reference(logits3, labels3, ratio)
    assert jnp.allclose(loss3, ref3, atol=2e-3, rtol=2e-3), (loss3, ref3)

    print("KERNEL_OK")
</pallas_src>

<mosaic_0001>
module attributes {stable_mosaic.version = 11 : i64} {
  func.func @_label_smooth_ce_kernel(%arg0: i32, %arg1: i32, %arg2: memref<8x32xf32, #tpu.memory_space<vmem>>, %arg3: memref<8x1xi32, #tpu.memory_space<vmem>>, %arg4: memref<8x1xf32, #tpu.memory_space<vmem>>) attributes {dimension_semantics = [#tpu.dimension_semantics<parallel>, #tpu.dimension_semantics<arbitrary>], iteration_bounds = array<i64: 1, 1>, scalar_prefetch = 0 : i64, scratch_operands = 0 : i64, tpu.core_type = #tpu.core_type<tc>, window_params = [{transform_indices = @transform_0, window_bounds = array<i64: 8, 32>}, {transform_indices = @transform_1, window_bounds = array<i64: 8, 1>}, {transform_indices = @transform_2, window_bounds = array<i64: 8, 1>}]} {
    %c0_i32 = arith.constant 0 : i32
    %0 = arith.cmpi eq, %arg1, %c0_i32 : i32
    %1 = arith.extui %0 : i1 to i32
    %c0_i32_0 = arith.constant 0 : i32
    %2 = arith.cmpi ne, %1, %c0_i32_0 : i32
    scf.if %2 {
      %cst_15 = arith.constant 0.000000e+00 : f32
      %35 = vector.broadcast %cst_15 : f32 to vector<8x1xf32>
      %c0_16 = arith.constant 0 : index
      %c0_17 = arith.constant 0 : index
      %36 = vector.load %arg4[%c0_16, %c0_17] : memref<8x1xf32, #tpu.memory_space<vmem>>, vector<8x1xf32>
      tpu.vector_store %arg4[%c0_16, %c0_17], %35 {strides = array<i32>} : memref<8x1xf32, #tpu.memory_space<vmem>>, vector<8x1xf32>,
    } else {
    }
    %c0 = arith.constant 0 : index
    %c0_1 = arith.constant 0 : index
    %3 = vector.load %arg2[%c0, %c0_1] : memref<8x32xf32, #tpu.memory_space<vmem>>, vector<8x32xf32>
    %cst = arith.constant dense<0xFF800000> : vector<8xf32>
    %4 = vector.multi_reduction <maximumf>, %3, %cst [1] : vector<8x32xf32> to vector<8xf32>
    %5 = vector.shape_cast %4 : vector<8xf32> to vector<8x1xf32>
    %6 = vector.broadcast %5 : vector<8x1xf32> to vector<8x32xf32>
    %7 = arith.subf %3, %6 : vector<8x32xf32>
    %8 = math.exp %7 : vector<8x32xf32>
    %cst_2 = arith.constant dense<0.000000e+00> : vector<8xf32>
    %9 = vector.multi_reduction <add>, %8, %cst_2 [1] : vector<8x32xf32> to vector<8xf32>
    %10 = vector.shape_cast %9 : vector<8xf32> to vector<8x1xf32>
    %11 = math.log %10 : vector<8x1xf32>
    %cst_3 = arith.constant dense<0.000000e+00> : vector<8xf32>
    %12 = vector.multi_reduction <add>, %3, %cst_3 [1] : vector<8x32xf32> to vector<8xf32>
    %13 = vector.shape_cast %12 : vector<8xf32> to vector<8x1xf32>
    %14 = tpu.iota {dimensions = array<i32: 1>} : vector<8x32xi32>
    %c0_4 = arith.constant 0 : index
    %c0_5 = arith.constant 0 : index
    %15 = vector.load %arg3[%c0_4, %c0_5] : memref<8x1xi32, #tpu.memory_space<vmem>>, vector<8x1xi32>
    %16 = vector.broadcast %15 : vector<8x1xi32> to vector<8x32xi32>
    %17 = arith.cmpi eq, %14, %16 : vector<8x32xi32>
    %cst_6 = arith.constant 0.000000e+00 : f32
    %18 = vector.broadcast %cst_6 : f32 to vector<8x32xf32>
    %19 = arith.select %17, %3, %18 : vector<8x32xi1>, vector<8x32xf32>
    %cst_7 = arith.constant dense<0.000000e+00> : vector<8xf32>
    %20 = vector.multi_reduction <add>, %19, %cst_7 [1] : vector<8x32xf32> to vector<8xf32>
    %21 = vector.shape_cast %20 : vector<8xf32> to vector<8x1xf32>
    %22 = arith.addf %5, %11 : vector<8x1xf32>
    %cst_8 = arith.constant 3.200000e+01 : f32
    %23 = vector.broadcast %cst_8 : f32 to vector<8x1xf32>
    %24 = arith.mulf %23, %22 : vector<8x1xf32>
    %25 = arith.subf %13, %24 : vector<8x1xf32>
    %cst_9 = arith.constant 0.0032258064 : f32
    %26 = vector.broadcast %cst_9 : f32 to vector<8x1xf32>
    %27 = arith.mulf %26, %25 : vector<8x1xf32>
    %28 = arith.subf %21, %22 : vector<8x1xf32>
    %cst_10 = arith.constant 0.993548393 : f32
    %29 = vector.broadcast %cst_10 : f32 to vector<8x1xf32>
    %30 = arith.mulf %29, %28 : vector<8x1xf32>
    %31 = arith.addf %27, %30 : vector<8x1xf32>
    %c0_11 = arith.constant 0 : index
    %c0_12 = arith.constant 0 : index
    %32 = vector.load %arg4[%c0_11, %c0_12] : memref<8x1xf32, #tpu.memory_space<vmem>>, vector<8x1xf32>
    %33 = arith.addf %32, %31 : vector<8x1xf32>
    %c0_13 = arith.constant 0 : index
    %c0_14 = arith.constant 0 : index
    %34 = vector.load %arg4[%c0_13, %c0_14] : memref<8x1xf32, #tpu.memory_space<vmem>>, vector<8x1xf32>
    tpu.vector_store %arg4[%c0_13, %c0_14], %33 {strides = array<i32>} : memref<8x1xf32, #tpu.memory_space<vmem>>, vector<8x1xf32>,
    return
  }
  func.func @transform_0(%arg0: i32, %arg1: i32) -> (i32, i32) {
    %c1_i32 = arith.constant 1 : i32
    %0 = arith.muli %arg0, %c1_i32 : i32
    %1 = arith.addi %0, %arg1 : i32
    %c0_i32 = arith.constant 0 : i32
    %c0_i32_0 = arith.constant 0 : i32
    return %1, %c0_i32 : i32, i32
  }
  func.func @transform_1(%arg0: i32, %arg1: i32) -> (i32, i32) {
    %c1_i32 = arith.constant 1 : i32
    %0 = arith.muli %arg0, %c1_i32 : i32
    %1 = arith.addi %0, %arg1 : i32
    %c0_i32 = arith.constant 0 : i32
    %c0_i32_0 = arith.constant 0 : i32
    return %1, %c0_i32 : i32, i32
  }
  func.func @transform_2(%arg0: i32, %arg1: i32) -> (i32, i32) {
    %c0_i32 = arith.constant 0 : i32
    %c0_i32_0 = arith.constant 0 : i32
    return %arg0, %c0_i32 : i32, i32
  }
}

</mosaic_0001>

<llo_original>
// kernel: tpu_custom_call.1
$region0: #{tpu_custom_call.1}
  #allocation0 [shape = 'u32[]', space=smem, size = 0x4, offset = 0x4, fixed_abs, tag = 'smem constant byte address 0x4 - core index']
  #allocation1 [shape = 'u32[72,128]{1,0:T(1,128)}', space=vmem, size = 0x9000, scoped, tag = 'internal scratch']
  %s0 = inlined_call_operand.vmem [shape: f32[8,32], index: 0, kind: input, shape index: {}]
  %s1 = inlined_call_operand.vmem [shape: s32[8,1], index: 1, kind: input, shape index: {}]
  %s2 = inlined_call_operand.vmem [shape: f32[8,1], index: 2, kind: output, shape index: {}]
  %s3 = sld [smem:[#allocation0]]
  $region22: #{tpu_custom_call.1} parent=0
    _
  %s5 = ssub.s32 1, %s3
  %s6 = scalar_select 0, %s5, %s3
  // Predicated region
  $region2: #{tpu_custom_call.1} parent=0 // pred_check
    _
  $region3: #{tpu_custom_call.1} parent=0 // pred_check_branch
    %8 = sbr.rel (0) target = $region5
  $region4: #{tpu_custom_call.1} parent=0 // pred_region
    %s9 = sadd.s32 0, 0
    %p10 = scmp.lt.s32.totalorder %s9, 0
    %s11 = scalar_select %p10, %s9, 0
    %s12 = smul.addr %s11, 8
    %s13 = scalar_lea.vmem %s0, %s12
    %s14 = sadd.s32 0, 0
  $region5: #{tpu_custom_call.1} parent=0 // pred_fallthru
    _
  // Predicated region
  $region6: #{tpu_custom_call.1} parent=0 // pred_check
    _
  $region7: #{tpu_custom_call.1} parent=0 // pred_check_branch
    %16 = sbr.rel (0) target = $region9
  $region8: #{tpu_custom_call.1} parent=0 // pred_region
    %s17 = sadd.s32 0, 0
    %p18 = scmp.lt.s32.totalorder %s17, 0
    %s19 = scalar_select %p18, %s17, 0
    %s20 = smul.addr %s19, 8
    %s21 = scalar_lea.vmem %s1, %s20
    %s22 = sadd.s32 0, 0
  $region9: #{tpu_custom_call.1} parent=0 // pred_fallthru
    _
  %s23 = sadd.s32 0, 0
  %p24 = scmp.lt.s32.totalorder %s23, 0
  %s25 = scalar_select %p24, %s23, 0
  %s26 = smul.addr %s25, 8
  %s27 = scalar_lea.vmem %s0, %s26
  %s28 = sadd.s32 0, 0
  %p29 = scmp.lt.s32.totalorder %s28, 0
  %s30 = scalar_select %p29, %s28, 0
  %s31 = smul.addr %s30, 8
  %s32 = scalar_lea.vmem %s1, %s31
  %s33 = sadd.s32 0, 0
  %p34 = scmp.lt.s32.totalorder %s33, 0
  %s35 = scalar_select %p34, %s33, 0
  %s36 = smul.addr %s35, 8
  %s37 = scalar_lea.vmem %s0, %s36
  %s38 = sadd.s32 0, 0
  %s39 = sadd.s32 0, 0
  %p40 = scmp.lt.s32.totalorder %s39, 0
  %s41 = scalar_select %p40, %s39, 0
  %s42 = smul.addr %s41, 8
  %s43 = scalar_lea.vmem %s1, %s42
  %s44 = sadd.s32 0, 0
  %p45 = scmp.eq.s32.totalorder 0, 0
  // Predicated region
  $region10: #{tpu_custom_call.1} parent=0 // pred_check
    %p46 = pneg %p45
  $region11: #{tpu_custom_call.1} parent=0 // pred_check_branch
    %48 = sbr.rel (%p46) target = $region13
  $region12: #{tpu_custom_call.1} parent=0 // pred_region
    %vm49 = vcmask 7168
    %50 = vst.msk [vmem:[%s2] sm:$0xff] %vm49, 0.0
  $region13: #{tpu_custom_call.1} parent=0 // pred_fallthru
    _
  %v51 = vld [vmem:[%s37] sm:$0xff]
  %vm52 = vcmask 261120
  %v53 = vsel %vm52, %v51, -inf
  %54 = vmax.xlane.f32.xlu0 %v53
  %v55 = vpop.xlane.xlu0 %54
  %v56 = vsub.f32 %v51, %v55
  %v57 = vmul.f32 %v56, 1.442695
  %v58 = vpow.pop %v57
  %v59 = vsel %vm52, %v58, 0.0
  %60 = vadd.xlane.f32.xlu0 %v59
  %v61 = vpop.xlane.xlu0 %60
  %v62 = vlog2.pop %v61
  %v63 = vmul.f32 %v62, 0.6931472
  %v64 = vsel %vm52, %v51, 0.0
  %65 = vadd.xlane.f32.xlu0 %v64
  %v66 = vpop.xlane.xlu0 %65
  %v67 = vlaneseq
  %v68 = vand.u32 %v67, 127
  %v69 = vld [vmem:[%s43] sm:$0xff]
  %70 = vset.pattern.permute.xlu0 0
  %71 = vperm.xlu0 %70, %v69
  %v72 = vpop.permute.xlu0 %71
  %vm73 = vcmp.eq.s32.totalorder %v68, %v72
  %v74 = vsel %vm73, %v51, 0.0
  %v75 = vsel %vm52, %v74, 0.0
  %76 = vadd.xlane.f32.xlu0 %v75
  %v77 = vpop.xlane.xlu0 %76
  %v78 = vadd.f32 %v55, %v63
  %v79 = vmul.f32 %v78, 32.0
  %v80 = vsub.f32 %v66, %v79
  %v81 = vmul.f32 %v80, 0.0032258064
  %v82 = vsub.f32 %v77, %v78
  %v83 = vmul.f32 %v82, 0.9935484
  %v84 = vadd.f32 %v81, %v83
  %v85 = vld [vmem:[%s2] sm:$0xff]
  %v86 = vadd.f32 %v85, %v84
  %vm87 = vcmask 7168
  %88 = vst.msk [vmem:[%s2] sm:$0xff] %vm87, %v86
  // Predicated region
  $region14: #{tpu_custom_call.1} parent=0 // pred_check
    _
  $region15: #{tpu_custom_call.1} parent=0 // pred_check_branch
    %90 = sbr.rel (0) target = $region17
  $region16: #{tpu_custom_call.1} parent=0 // pred_region
    _
  $region17: #{tpu_custom_call.1} parent=0 // pred_fallthru
    _
  // Predicated region
  $region18: #{tpu_custom_call.1} parent=0 // pred_check
    _
  $region19: #{tpu_custom_call.1} parent=0 // pred_check_branch
    %92 = sbr.rel (0) target = $region21
  $region20: #{tpu_custom_call.1} parent=0 // pred_region
    _
  $region21: #{tpu_custom_call.1} parent=0 // pred_fallthru
    _

</llo_original>
